<compile_context>
chip_gen: v5e
topology: v5e:2x2
jax: 0.10.0
libtpu: 0.0.40
codegen_flags: <defaults>
</compile_context>

<pallas_src>
import numpy as np
import jax
import jax.numpy as jnp
from jax.experimental import pallas as pl
from jax.experimental.pallas import tpu as pltpu


def _cdiv(a, b):
    return -(-a // b)


def _bilstm_kernel(x_ref, len_ref,
                   wih_f_ref, whh_f_ref, bf_ref,
                   wih_b_ref, whh_b_ref, bb_ref,
                   out_ref,
                   xgf_scr, xgb_scr):
    # x_ref:   [T, TB, D]    (time-major batch tile)
    # out_ref: [T, TB, 2H]   (time-major; transposed back to batch-first outside)
    # xg*_scr: [Tc, TB, 4H]  per-direction chunked projection scratch
    T, B, D = x_ref.shape
    H = whh_f_ref.shape[0]
    G = 4 * H
    Tc = xgf_scr.shape[0]
    n_chunks = T // Tc                         # wrapper guarantees T % Tc == 0

    lens = len_ref[...]                        # [B, 1] int32

    # Loaded once, hoisted out of all loops.
    wih_f = wih_f_ref[...]                     # [D, G]
    wih_b = wih_b_ref[...]
    b_f = bf_ref[...]                          # [1, G]
    b_b = bb_ref[...]
    cdt = xgf_scr.dtype                        # recurrent-path compute dtype
    whh_f = whh_f_ref[...].astype(cdt)         # [H, G]
    whh_b = whh_b_ref[...].astype(cdt)

    def act(gates, c_prev):
        # gate order (i, f, o, g): one contiguous sigmoid slab + one tanh slab.
        sg = jax.nn.sigmoid(gates[:, 0:3 * H])
        i_g = sg[:, 0:H]
        f_g = sg[:, H:2 * H]
        o_g = sg[:, 2 * H:3 * H]
        g_g = jnp.tanh(gates[:, 3 * H:4 * H])
        c_new = f_g * c_prev + i_g * g_g
        h_new = o_g * jnp.tanh(c_new)
        return h_new, c_new

    def chunk_body(c, carry):
        # Forward consumes chunk c (t ascending); backward simultaneously consumes
        # chunk n_chunks-1-c (t descending).  With T % Tc == 0 the global time
        # order of each direction is preserved, and both serial recurrences stay
        # fused in one loop (two independent latency chains -> more ILP).
        cb = n_chunks - 1 - c
        t0_f = pl.multiple_of(c * Tc, Tc)
        t0_b = pl.multiple_of(cb * Tc, Tc)

        # Per-chunk input projections (dominant FLOPs, big MXU matmuls,
        # f32 accumulate).  Bias folded here -> no per-step broadcast add.
        xf = x_ref[pl.ds(t0_f, Tc)].reshape(Tc * B, D)
        xb = x_ref[pl.ds(t0_b, Tc)].reshape(Tc * B, D)
        xgf_scr[...] = (jnp.dot(xf, wih_f, preferred_element_type=jnp.float32)
                        + b_f).reshape(Tc, B, G).astype(cdt)
        xgb_scr[...] = (jnp.dot(xb, wih_b, preferred_element_type=jnp.float32)
                        + b_b).reshape(Tc, B, G).astype(cdt)

        def step(j, st):
            h_f, c_f, h_b, c_b = st
            t_f = t0_f + j
            t_b = t0_b + (Tc - 1 - j)

            # ---- forward direction, timestep t_f ----
            g_f = (xgf_scr[j].astype(jnp.float32)
                   + jnp.dot(h_f.astype(cdt), whh_f,
                             preferred_element_type=jnp.float32))
            h_fn, c_fn = act(g_f, c_f)
            valid_f = t_f < lens                       # [B, 1] bool
            out_ref[t_f, :, 0:H] = jnp.where(valid_f, h_fn, 0.0)
            h_f = jnp.where(valid_f, h_fn, h_f)        # packed-seq: state frozen past len
            c_f = jnp.where(valid_f, c_fn, c_f)

            # ---- backward direction, timestep t_b ----
            g_b = (xgb_scr[Tc - 1 - j].astype(jnp.float32)
                   + jnp.dot(h_b.astype(cdt), whh_b,
                             preferred_element_type=jnp.float32))
            h_bn, c_bn = act(g_b, c_b)
            valid_b = t_b < lens
            out_ref[t_b, :, H:2 * H] = jnp.where(valid_b, h_bn, 0.0)
            h_b = jnp.where(valid_b, h_bn, h_b)
            c_b = jnp.where(valid_b, c_bn, c_b)
            return (h_f, c_f, h_b, c_b)

        return jax.lax.fori_loop(0, Tc, step, carry)

    z = jnp.zeros((B, H), jnp.float32)
    jax.lax.fori_loop(0, n_chunks, chunk_body, (z, z, z, z))


def _reorder_gates(w):
    """Host-side gate-column reorder: torch (i, f, g, o) -> kernel (i, f, o, g)."""
    H = w.shape[-1] // 4
    return jnp.concatenate(
        [w[..., 0:H], w[..., H:2 * H], w[..., 3 * H:4 * H], w[..., 2 * H:3 * H]],
        axis=-1)


def bilstm_pallas(x, seq_lengths, params, t_out=None, batch_tile=None,
                  time_chunk=64, compute_dtype=jnp.float32):
    """Bidirectional LSTM forward with pack/pad_packed semantics.

    t_out: static Python int = max(seq_lengths). If None it is computed eagerly
           (not valid under jax.jit -- pass it explicitly there).
    compute_dtype: dtype of the projection scratch and the recurrent-matmul
           operands.  float32 (default) is safest / right for v5e; bfloat16 is
           the fast path on v6e/v7x (re-validate accuracy at production T).
    """
    B, T, D = x.shape
    H = params["whh_f"].shape[0]
    G = 4 * H

    if t_out is None:
        t_out = int(np.max(np.asarray(jax.device_get(seq_lengths))))
    t_out = int(t_out)

    # --- time tiling: only run up to max(seq_lengths), rounded up to the chunk
    # size so forward chunk c pairs exactly with backward chunk n_chunks-1-c.
    Tc = int(max(1, min(int(time_chunk), t_out)))
    T_k = Tc * _cdiv(t_out, Tc)
    if T >= T_k:
        x_k = x[:, :T_k, :]
    else:
        x_k = jnp.pad(x, ((0, 0), (0, T_k - T), (0, 0)))

    # --- batch tiling: multiple-of-8 tiles (copy-free reshapes, sublane aligned);
    # default targets a grid >= 2 so both v7x TensorCores get work.
    if batch_tile is not None:
        TB = int(batch_tile)
    elif B < 16:
        TB = B
    else:
        TB = 8 * _cdiv(_cdiv(B, 2), 8)
    n_b = _cdiv(B, TB)
    B_pad = n_b * TB

    lens2d = jnp.asarray(seq_lengths, jnp.int32).reshape(B, 1)
    if B_pad > B:
        # Pad with zero-length rows (outputs all-zero, sliced off below) instead
        # of relying on edge-padding behavior for a partial last tile.
        x_k = jnp.pad(x_k, ((0, B_pad - B), (0, 0), (0, 0)))
        lens2d = jnp.pad(lens2d, ((0, B_pad - B), (0, 0)))

    x_tm = jnp.transpose(x_k, (1, 0, 2))          # [T_k, B_pad, D] time-major

    # TODO(synk): for lane-aligned (unmasked) out_ref stores, pad H host-side to a
    # multiple of 128 when the model's hidden size is not already 128-aligned.
    wih_f = _reorder_gates(params["wih_f"])
    whh_f = _reorder_gates(params["whh_f"])
    b_f = _reorder_gates(params["b_f"])
    wih_b = _reorder_gates(params["wih_b"])
    whh_b = _reorder_gates(params["whh_b"])
    b_b = _reorder_gates(params["b_b"])

    # VMEM budget: double-buffered x/out blocks + weights (x2 buffers) + scratches.
    scr_bytes = 2 * Tc * TB * G * jnp.dtype(compute_dtype).itemsize
    io_bytes = 2 * (T_k * TB * D + T_k * TB * 2 * H) * 4
    w_bytes = 2 * (2 * D * G + 2 * H * G + 2 * G) * 4
    vmem_limit = int(min(128 * 1024 * 1024,
                         max(32 * 1024 * 1024,
                             int(1.5 * (scr_bytes + io_bytes + w_bytes)))))

    out_tm = pl.pallas_call(
        _bilstm_kernel,
        out_shape=jax.ShapeDtypeStruct((T_k, B_pad, 2 * H), jnp.float32),
        grid=(n_b,),
        in_specs=[
            pl.BlockSpec((T_k, TB, D), lambda b: (0, b, 0)),   # x (time-major)
            pl.BlockSpec((TB, 1), lambda b: (b, 0)),           # seq lengths
            pl.BlockSpec((D, G), lambda b: (0, 0)),            # W_ih^T fwd
            pl.BlockSpec((H, G), lambda b: (0, 0)),            # W_hh^T fwd
            pl.BlockSpec((1, G), lambda b: (0, 0)),            # bias fwd
            pl.BlockSpec((D, G), lambda b: (0, 0)),            # W_ih^T bwd
            pl.BlockSpec((H, G), lambda b: (0, 0)),            # W_hh^T bwd
            pl.BlockSpec((1, G), lambda b: (0, 0)),            # bias bwd
        ],
        out_specs=pl.BlockSpec((T_k, TB, 2 * H), lambda b: (0, b, 0)),
        scratch_shapes=[pltpu.VMEM((Tc, TB, G), compute_dtype),
                        pltpu.VMEM((Tc, TB, G), compute_dtype)],
        compiler_params=pltpu.CompilerParams(
            dimension_semantics=("parallel",),
            vmem_limit_bytes=vmem_limit),
    )(x_tm, lens2d, wih_f, whh_f, b_f, wih_b, whh_b, b_b)

    out = jnp.transpose(out_tm, (1, 0, 2))        # batch-first [B_pad, T_k, 2H]
    return out[:B, :t_out, :]


def init_params(key, input_size, hidden_size):
    H = hidden_size
    bound = 1.0 / np.sqrt(H)                      # torch.nn.LSTM default init
    ks = jax.random.split(key, 8)
    u = lambda k, shape: jax.random.uniform(k, shape, jnp.float32, -bound, bound)
    return {
        "wih_f": u(ks[0], (input_size, 4 * H)),
        "whh_f": u(ks[1], (H, 4 * H)),
        "b_f":   u(ks[2], (1, 4 * H)) + u(ks[3], (1, 4 * H)),   # b_ih + b_hh
        "wih_b": u(ks[4], (input_size, 4 * H)),
        "whh_b": u(ks[5], (H, 4 * H)),
        "b_b":   u(ks[6], (1, 4 * H)) + u(ks[7], (1, 4 * H)),
    }


def bilstm_ref(x, seq_lengths, params):
    """Pure numpy reference (float64) with identical packed-sequence semantics."""
    x = np.asarray(x, np.float64)
    lengths = np.asarray(seq_lengths)
    B, T, _ = x.shape
    H = params["whh_f"].shape[0]
    p = {k: np.asarray(v, np.float64) for k, v in params.items()}
    out = np.zeros((B, T, 2 * H), np.float64)
    sig = lambda z: 1.0 / (1.0 + np.exp(-z))

    def run(b, wih, whh, bias, ts, lo):
        h = np.zeros(H); c = np.zeros(H)
        for t in ts:
            g = x[b, t] @ wih + h @ whh + bias[0]
            i = sig(g[0:H]); f = sig(g[H:2 * H])
            gg = np.tanh(g[2 * H:3 * H]); o = sig(g[3 * H:4 * H])
            c = f * c + i * gg
            h = o * np.tanh(c)
            out[b, t, lo:lo + H] = h

    for b in range(B):
        L = int(lengths[b])
        run(b, p["wih_f"], p["whh_f"], p["b_f"], range(L), 0)
        run(b, p["wih_b"], p["whh_b"], p["b_b"], range(L - 1, -1, -1), H)
    return out[:, :int(lengths.max()), :].astype(np.float32)


if __name__ == "__main__":
    # Small but representative: batch 16 -> two 8-row tiles (grid=2, parallel),
    # T=10 with time_chunk=4 -> padded to 12, 3 fwd/bwd chunk pairs, ragged lengths.
    B, T, D, H = 16, 10, 16, 32
    key = jax.random.PRNGKey(0)
    kx, kp = jax.random.split(key)
    x = jax.random.normal(kx, (B, T, D), jnp.float32)
    seq_lengths = jnp.array([7, 10, 4, 9, 10, 1, 6, 8, 3, 10, 5, 2, 9, 10, 8, 6],
                            dtype=jnp.int32)                 # unsorted (enforce_sorted=False)
    params = init_params(kp, D, H)

    out = bilstm_pallas(x, seq_lengths, params, time_chunk=4)
    out = jax.block_until_ready(out)

    ref = bilstm_ref(x, seq_lengths, params)
    # Default MXU precision (bf16 passes, f32 accumulate) -> loose-ish tolerance.
    np.testing.assert_allclose(np.asarray(out), ref, atol=2e-2, rtol=2e-2)
    print("KERNEL_OK")
</pallas_src>

<mosaic_0001>
module attributes {stable_mosaic.version = 11 : i64} {
  func.func @_bilstm_kernel(%arg0: i32, %arg1: memref<12x8x16xf32, #tpu.memory_space<vmem>>, %arg2: memref<8x1xi32, #tpu.memory_space<vmem>>, %arg3: memref<16x128xf32, #tpu.memory_space<vmem>>, %arg4: memref<32x128xf32, #tpu.memory_space<vmem>>, %arg5: memref<1x128xf32, #tpu.memory_space<vmem>>, %arg6: memref<16x128xf32, #tpu.memory_space<vmem>>, %arg7: memref<32x128xf32, #tpu.memory_space<vmem>>, %arg8: memref<1x128xf32, #tpu.memory_space<vmem>>, %arg9: memref<12x8x64xf32, #tpu.memory_space<vmem>>, %arg10: memref<4x8x128xf32, #tpu.memory_space<vmem>>, %arg11: memref<4x8x128xf32, #tpu.memory_space<vmem>>) attributes {dimension_semantics = [#tpu.dimension_semantics<parallel>], iteration_bounds = array<i64: 2>, scalar_prefetch = 0 : i64, scratch_operands = 2 : i64, tpu.core_type = #tpu.core_type<tc>, window_params = [{transform_indices = @transform_0, window_bounds = array<i64: 12, 8, 16>}, {transform_indices = @transform_1, window_bounds = array<i64: 8, 1>}, {pipeline_mode = #tpu.pipeline_mode<synchronous>, transform_indices = @transform_2, window_bounds = array<i64: 16, 128>}, {pipeline_mode = #tpu.pipeline_mode<synchronous>, transform_indices = @transform_3, window_bounds = array<i64: 32, 128>}, {pipeline_mode = #tpu.pipeline_mode<synchronous>, transform_indices = @transform_4, window_bounds = array<i64: 1, 128>}, {pipeline_mode = #tpu.pipeline_mode<synchronous>, transform_indices = @transform_5, window_bounds = array<i64: 16, 128>}, {pipeline_mode = #tpu.pipeline_mode<synchronous>, transform_indices = @transform_6, window_bounds = array<i64: 32, 128>}, {pipeline_mode = #tpu.pipeline_mode<synchronous>, transform_indices = @transform_7, window_bounds = array<i64: 1, 128>}, {transform_indices = @transform_8, window_bounds = array<i64: 12, 8, 64>}]} {
    %c0 = arith.constant 0 : index
    %c0_0 = arith.constant 0 : index
    %0 = vector.load %arg2[%c0, %c0_0] : memref<8x1xi32, #tpu.memory_space<vmem>>, vector<8x1xi32>
    %c0_1 = arith.constant 0 : index
    %c0_2 = arith.constant 0 : index
    %1 = vector.load %arg3[%c0_1, %c0_2] : memref<16x128xf32, #tpu.memory_space<vmem>>, vector<16x128xf32>
    %c0_3 = arith.constant 0 : index
    %c0_4 = arith.constant 0 : index
    %2 = vector.load %arg6[%c0_3, %c0_4] : memref<16x128xf32, #tpu.memory_space<vmem>>, vector<16x128xf32>
    %c0_5 = arith.constant 0 : index
    %c0_6 = arith.constant 0 : index
    %3 = vector.load %arg5[%c0_5, %c0_6] : memref<1x128xf32, #tpu.memory_space<vmem>>, vector<1x128xf32>
    %c0_7 = arith.constant 0 : index
    %c0_8 = arith.constant 0 : index
    %4 = vector.load %arg8[%c0_7, %c0_8] : memref<1x128xf32, #tpu.memory_space<vmem>>, vector<1x128xf32>
    %c0_9 = arith.constant 0 : index
    %c0_10 = arith.constant 0 : index
    %5 = vector.load %arg4[%c0_9, %c0_10] : memref<32x128xf32, #tpu.memory_space<vmem>>, vector<32x128xf32>
    %c0_11 = arith.constant 0 : index
    %c0_12 = arith.constant 0 : index
    %6 = vector.load %arg7[%c0_11, %c0_12] : memref<32x128xf32, #tpu.memory_space<vmem>>, vector<32x128xf32>
    %cst = arith.constant 0.000000e+00 : f32
    %7 = vector.broadcast %cst : f32 to vector<8x32xf32>
    %c0_i32 = arith.constant 0 : i32
    %c3_i32 = arith.constant 3 : i32
    %8 = arith.addi %c0_i32, %c3_i32 : i32
    %c1_i32 = arith.constant 1 : i32
    %9:4 = scf.for %arg12 = %c0_i32 to %8 step %c1_i32 iter_args(%arg13 = %7, %arg14 = %7, %arg15 = %7, %arg16 = %7) -> (vector<8x32xf32>, vector<8x32xf32>, vector<8x32xf32>, vector<8x32xf32>)  : i32 {
      %c2_i32 = arith.constant 2 : i32
      %10 = arith.subi %c2_i32, %arg12 : i32
      %c4_i32 = arith.constant 4 : i32
      %11 = arith.muli %arg12, %c4_i32 : i32
      %12 = tpu.assume_multiple %11, 4 : i32
      %c4_i32_14 = arith.constant 4 : i32
      %13 = arith.muli %10, %c4_i32_14 : i32
      %14 = tpu.assume_multiple %13, 4 : i32
      %15 = arith.index_cast %12 : i32 to index
      %c0_15 = arith.constant 0 : index
      %c0_16 = arith.constant 0 : index
      %16 = vector.load %arg1[%15, %c0_15, %c0_16] : memref<12x8x16xf32, #tpu.memory_space<vmem>>, vector<4x8x16xf32>
      %17 = vector.shape_cast %16 : vector<4x8x16xf32> to vector<32x16xf32>
      %18 = arith.index_cast %14 : i32 to index
      %c0_17 = arith.constant 0 : index
      %c0_18 = arith.constant 0 : index
      %19 = vector.load %arg1[%18, %c0_17, %c0_18] : memref<12x8x16xf32, #tpu.memory_space<vmem>>, vector<4x8x16xf32>
      %20 = vector.shape_cast %19 : vector<4x8x16xf32> to vector<32x16xf32>
      %cst_19 = arith.constant dense<0.000000e+00> : vector<32x128xf32>
      %21 = tpu.matmul %17, %1, %cst_19 {dimension_numbers = #tpu.dot_dimension_numbers<[1], [0], [0], [1], [0, 0, 1, 1], [], []>} : vector<32x16xf32>, vector<16x128xf32>, vector<32x128xf32> -> vector<32x128xf32>
      %22 = vector.broadcast %3 : vector<1x128xf32> to vector<32x128xf32>
      %23 = arith.addf %21, %22 : vector<32x128xf32>
      %24 = vector.shape_cast %23 : vector<32x128xf32> to vector<4x8x128xf32>
      %c0_20 = arith.constant 0 : index
      %c0_21 = arith.constant 0 : index
      %c0_22 = arith.constant 0 : index
      %25 = vector.load %arg10[%c0_20, %c0_21, %c0_22] : memref<4x8x128xf32, #tpu.memory_space<vmem>>, vector<4x8x128xf32>
      tpu.vector_store %arg10[%c0_20, %c0_21, %c0_22], %24 {strides = array<i32>} : memref<4x8x128xf32, #tpu.memory_space<vmem>>, vector<4x8x128xf32>,
      %cst_23 = arith.constant dense<0.000000e+00> : vector<32x128xf32>
      %26 = tpu.matmul %20, %2, %cst_23 {dimension_numbers = #tpu.dot_dimension_numbers<[1], [0], [0], [1], [0, 0, 1, 1], [], []>} : vector<32x16xf32>, vector<16x128xf32>, vector<32x128xf32> -> vector<32x128xf32>
      %27 = vector.broadcast %4 : vector<1x128xf32> to vector<32x128xf32>
      %28 = arith.addf %26, %27 : vector<32x128xf32>
      %29 = vector.shape_cast %28 : vector<32x128xf32> to vector<4x8x128xf32>
      %c0_24 = arith.constant 0 : index
      %c0_25 = arith.constant 0 : index
      %c0_26 = arith.constant 0 : index
      %30 = vector.load %arg11[%c0_24, %c0_25, %c0_26] : memref<4x8x128xf32, #tpu.memory_space<vmem>>, vector<4x8x128xf32>
      tpu.vector_store %arg11[%c0_24, %c0_25, %c0_26], %29 {strides = array<i32>} : memref<4x8x128xf32, #tpu.memory_space<vmem>>, vector<4x8x128xf32>,
      %c0_i32_27 = arith.constant 0 : i32
      %c4_i32_28 = arith.constant 4 : i32
      %31 = arith.addi %c0_i32_27, %c4_i32_28 : i32
      %c1_i32_29 = arith.constant 1 : i32
      %32:4 = scf.for %arg17 = %c0_i32_27 to %31 step %c1_i32_29 iter_args(%arg18 = %arg13, %arg19 = %arg14, %arg20 = %arg15, %arg21 = %arg16) -> (vector<8x32xf32>, vector<8x32xf32>, vector<8x32xf32>, vector<8x32xf32>)  : i32 {
        %33 = arith.addi %12, %arg17 : i32
        %c3_i32_31 = arith.constant 3 : i32
        %34 = arith.subi %c3_i32_31, %arg17 : i32
        %35 = arith.addi %14, %34 : i32
        %36 = arith.index_cast %arg17 : i32 to index
        %c0_32 = arith.constant 0 : index
        %c0_33 = arith.constant 0 : index
        %37 = vector.load %arg10[%36, %c0_32, %c0_33] : memref<4x8x128xf32, #tpu.memory_space<vmem>>, vector<1x8x128xf32>
        %38 = vector.shape_cast %37 : vector<1x8x128xf32> to vector<8x128xf32>
        %cst_34 = arith.constant dense<0.000000e+00> : vector<8x128xf32>
        %39 = tpu.matmul %arg18, %5, %cst_34 {dimension_numbers = #tpu.dot_dimension_numbers<[1], [0], [0], [1], [0, 0, 1, 1], [], []>} : vector<8x32xf32>, vector<32x128xf32>, vector<8x128xf32> -> vector<8x128xf32>
        %40 = arith.addf %38, %39 : vector<8x128xf32>
        %41 = vector.extract_strided_slice %40 {offsets = [0, 0], sizes = [8, 96], strides = [1, 1]} : vector<8x128xf32> to vector<8x96xf32>
        %42 = arith.negf %41 : vector<8x96xf32>
        %43 = math.exp %42 : vector<8x96xf32>
        %cst_35 = arith.constant 1.000000e+00 : f32
        %44 = vector.broadcast %cst_35 : f32 to vector<8x96xf32>
        %45 = arith.addf %44, %43 : vector<8x96xf32>
        %46 = arith.divf %44, %45 : vector<8x96xf32>
        %47 = vector.extract_strided_slice %46 {offsets = [0, 0], sizes = [8, 32], strides = [1, 1]} : vector<8x96xf32> to vector<8x32xf32>
        %48 = vector.extract_strided_slice %46 {offsets = [0, 32], sizes = [8, 32], strides = [1, 1]} : vector<8x96xf32> to vector<8x32xf32>
        %49 = vector.extract_strided_slice %46 {offsets = [0, 64], sizes = [8, 32], strides = [1, 1]} : vector<8x96xf32> to vector<8x32xf32>
        %50 = vector.extract_strided_slice %40 {offsets = [0, 96], sizes = [8, 32], strides = [1, 1]} : vector<8x128xf32> to vector<8x32xf32>
        %51 = math.tanh %50 : vector<8x32xf32>
        %52 = arith.mulf %48, %arg19 : vector<8x32xf32>
        %53 = arith.mulf %47, %51 : vector<8x32xf32>
        %54 = arith.addf %52, %53 : vector<8x32xf32>
        %55 = math.tanh %54 : vector<8x32xf32>
        %56 = arith.mulf %49, %55 : vector<8x32xf32>
        %57 = vector.broadcast %33 : i32 to vector<8x1xi32>
        %58 = arith.cmpi slt, %57, %0 : vector<8x1xi32>
        %cst_36 = arith.constant 0.000000e+00 : f32
        %59 = vector.shape_cast %58 : vector<8x1xi1> to vector<8x1xi1>
        %60 = vector.broadcast %59 : vector<8x1xi1> to vector<8x32xi1>
        %61 = vector.broadcast %cst_36 : f32 to vector<8x32xf32>
        %62 = arith.select %60, %56, %61 : vector<8x32xi1>, vector<8x32xf32>
        %63 = arith.index_cast %33 : i32 to index
        %c0_37 = arith.constant 0 : index
        %c0_38 = arith.constant 0 : index
        %64 = vector.load %arg9[%63, %c0_37, %c0_38] : memref<12x8x64xf32, #tpu.memory_space<vmem>>, vector<1x8x32xf32>
        %65 = vector.shape_cast %64 : vector<1x8x32xf32> to vector<8x32xf32>
        %66 = vector.shape_cast %62 : vector<8x32xf32> to vector<1x8x32xf32>
        tpu.vector_store %arg9[%63, %c0_37, %c0_38], %66 {strides = array<i32>} : memref<12x8x64xf32, #tpu.memory_space<vmem>>, vector<1x8x32xf32>,
        %67 = vector.shape_cast %58 : vector<8x1xi1> to vector<8x1xi1>
        %68 = vector.broadcast %67 : vector<8x1xi1> to vector<8x32xi1>
        %69 = arith.select %68, %56, %arg18 : vector<8x32xi1>, vector<8x32xf32>
        %70 = vector.shape_cast %58 : vector<8x1xi1> to vector<8x1xi1>
        %71 = vector.broadcast %70 : vector<8x1xi1> to vector<8x32xi1>
        %72 = arith.select %71, %54, %arg19 : vector<8x32xi1>, vector<8x32xf32>
        %c3_i32_39 = arith.constant 3 : i32
        %73 = arith.subi %c3_i32_39, %arg17 : i32
        %74 = arith.index_cast %73 : i32 to index
        %c0_40 = arith.constant 0 : index
        %c0_41 = arith.constant 0 : index
        %75 = vector.load %arg11[%74, %c0_40, %c0_41] : memref<4x8x128xf32, #tpu.memory_space<vmem>>, vector<1x8x128xf32>
        %76 = vector.shape_cast %75 : vector<1x8x128xf32> to vector<8x128xf32>
        %cst_42 = arith.constant dense<0.000000e+00> : vector<8x128xf32>
        %77 = tpu.matmul %arg20, %6, %cst_42 {dimension_numbers = #tpu.dot_dimension_numbers<[1], [0], [0], [1], [0, 0, 1, 1], [], []>} : vector<8x32xf32>, vector<32x128xf32>, vector<8x128xf32> -> vector<8x128xf32>
        %78 = arith.addf %76, %77 : vector<8x128xf32>
        %79 = vector.extract_strided_slice %78 {offsets = [0, 0], sizes = [8, 96], strides = [1, 1]} : vector<8x128xf32> to vector<8x96xf32>
        %80 = arith.negf %79 : vector<8x96xf32>
        %81 = math.exp %80 : vector<8x96xf32>
        %cst_43 = arith.constant 1.000000e+00 : f32
        %82 = vector.broadcast %cst_43 : f32 to vector<8x96xf32>
        %83 = arith.addf %82, %81 : vector<8x96xf32>
        %84 = arith.divf %82, %83 : vector<8x96xf32>
        %85 = vector.extract_strided_slice %84 {offsets = [0, 0], sizes = [8, 32], strides = [1, 1]} : vector<8x96xf32> to vector<8x32xf32>
        %86 = vector.extract_strided_slice %84 {offsets = [0, 32], sizes = [8, 32], strides = [1, 1]} : vector<8x96xf32> to vector<8x32xf32>
        %87 = vector.extract_strided_slice %84 {offsets = [0, 64], sizes = [8, 32], strides = [1, 1]} : vector<8x96xf32> to vector<8x32xf32>
        %88 = vector.extract_strided_slice %78 {offsets = [0, 96], sizes = [8, 32], strides = [1, 1]} : vector<8x128xf32> to vector<8x32xf32>
        %89 = math.tanh %88 : vector<8x32xf32>
        %90 = arith.mulf %86, %arg21 : vector<8x32xf32>
        %91 = arith.mulf %85, %89 : vector<8x32xf32>
        %92 = arith.addf %90, %91 : vector<8x32xf32>
        %93 = math.tanh %92 : vector<8x32xf32>
        %94 = arith.mulf %87, %93 : vector<8x32xf32>
        %95 = vector.broadcast %35 : i32 to vector<8x1xi32>
        %96 = arith.cmpi slt, %95, %0 : vector<8x1xi32>
        %cst_44 = arith.constant 0.000000e+00 : f32
        %97 = vector.shape_cast %96 : vector<8x1xi1> to vector<8x1xi1>
        %98 = vector.broadcast %97 : vector<8x1xi1> to vector<8x32xi1>
        %99 = vector.broadcast %cst_44 : f32 to vector<8x32xf32>
        %100 = arith.select %98, %94, %99 : vector<8x32xi1>, vector<8x32xf32>
        %101 = arith.index_cast %35 : i32 to index
        %c0_45 = arith.constant 0 : index
        %c32 = arith.constant 32 : index
        %102 = vector.load %arg9[%101, %c0_45, %c32] : memref<12x8x64xf32, #tpu.memory_space<vmem>>, vector<1x8x32xf32>
        %103 = vector.shape_cast %102 : vector<1x8x32xf32> to vector<8x32xf32>
        %104 = vector.shape_cast %100 : vector<8x32xf32> to vector<1x8x32xf32>
        tpu.vector_store %arg9[%101, %c0_45, %c32], %104 {strides = array<i32>} : memref<12x8x64xf32, #tpu.memory_space<vmem>>, vector<1x8x32xf32>,
        %105 = vector.shape_cast %96 : vector<8x1xi1> to vector<8x1xi1>
        %106 = vector.broadcast %105 : vector<8x1xi1> to vector<8x32xi1>
        %107 = arith.select %106, %94, %arg20 : vector<8x32xi1>, vector<8x32xf32>
        %108 = vector.shape_cast %96 : vector<8x1xi1> to vector<8x1xi1>
        %109 = vector.broadcast %108 : vector<8x1xi1> to vector<8x32xi1>
        %110 = arith.select %109, %92, %arg21 : vector<8x32xi1>, vector<8x32xf32>
        scf.yield %69, %72, %107, %110 : vector<8x32xf32>, vector<8x32xf32>, vector<8x32xf32>, vector<8x32xf32>
      }
      %c4_i32_30 = arith.constant 4 : i32
      scf.yield %32#0, %32#1, %32#2, %32#3 : vector<8x32xf32>, vector<8x32xf32>, vector<8x32xf32>, vector<8x32xf32>
    }
    %c3_i32_13 = arith.constant 3 : i32
    return
  }
  func.func @transform_0(%arg0: i32) -> (i32, i32, i32) {
    %c0_i32 = arith.constant 0 : i32
    %c0_i32_0 = arith.constant 0 : i32
    %c0_i32_1 = arith.constant 0 : i32
    return %c0_i32, %arg0, %c0_i32_0 : i32, i32, i32
  }
  func.func @transform_1(%arg0: i32) -> (i32, i32) {
    %c0_i32 = arith.constant 0 : i32
    %c0_i32_0 = arith.constant 0 : i32
    return %arg0, %c0_i32 : i32, i32
  }
  func.func @transform_2(%arg0: i32) -> (i32, i32) {
    %c0_i32 = arith.constant 0 : i32
    %c0_i32_0 = arith.constant 0 : i32
    %c0_i32_1 = arith.constant 0 : i32
    return %c0_i32, %c0_i32_0 : i32, i32
  }
  func.func @transform_3(%arg0: i32) -> (i32, i32) {
    %c0_i32 = arith.constant 0 : i32
    %c0_i32_0 = arith.constant 0 : i32
    %c0_i32_1 = arith.constant 0 : i32
    return %c0_i32, %c0_i32_0 : i32, i32
  }
  func.func @transform_4(%arg0: i32) -> (i32, i32) {
    %c0_i32 = arith.constant 0 : i32
    %c0_i32_0 = arith.constant 0 : i32
    %c0_i32_1 = arith.constant 0 : i32
    return %c0_i32, %c0_i32_0 : i32, i32
  }
  func.func @transform_5(%arg0: i32) -> (i32, i32) {
    %c0_i32 = arith.constant 0 : i32
    %c0_i32_0 = arith.constant 0 : i32
    %c0_i32_1 = arith.constant 0 : i32
    return %c0_i32, %c0_i32_0 : i32, i32
  }
  func.func @transform_6(%arg0: i32) -> (i32, i32) {
    %c0_i32 = arith.constant 0 : i32
    %c0_i32_0 = arith.constant 0 : i32
    %c0_i32_1 = arith.constant 0 : i32
    return %c0_i32, %c0_i32_0 : i32, i32
  }
  func.func @transform_7(%arg0: i32) -> (i32, i32) {
    %c0_i32 = arith.constant 0 : i32
    %c0_i32_0 = arith.constant 0 : i32
    %c0_i32_1 = arith.constant 0 : i32
    return %c0_i32, %c0_i32_0 : i32, i32
  }
  func.func @transform_8(%arg0: i32) -> (i32, i32, i32) {
    %c0_i32 = arith.constant 0 : i32
    %c0_i32_0 = arith.constant 0 : i32
    %c0_i32_1 = arith.constant 0 : i32
    return %c0_i32, %arg0, %c0_i32_0 : i32, i32, i32
  }
}

</mosaic_0001>

<llo_original>
// kernel: tpu_custom_call.1
$region0: #{tpu_custom_call.1}
  #allocation0 [shape = 'u32[]', space=smem, size = 0x4, offset = 0x4, fixed_abs, tag = 'smem constant byte address 0x4 - core index']
  #allocation1 [shape = 'u32[72,128]{1,0:T(1,128)}', space=vmem, size = 0x9000, scoped, tag = 'internal scratch']
  #allocation2 [shape = 'f32[4,8,128]{2,1,0:T(8,128)}', space=vmem, size = 0x4000, scoped, tag = 'scratch operand']
  #allocation3 [shape = 'f32[4,8,128]{2,1,0:T(8,128)}', space=vmem, size = 0x4000, scoped, tag = 'scratch operand']
  %s0 = inlined_call_operand.hbm [shape: f32[12,16,16], index: 0, kind: input, shape index: {}]
  %s1 = inlined_call_operand.vmem [shape: s32[16,1], index: 1, kind: input, shape index: {}]
  %s2 = inlined_call_operand.vmem [shape: f32[16,128], index: 2, kind: input, shape index: {}]
  %s3 = inlined_call_operand.hbm [shape: f32[32,128], index: 3, kind: input, shape index: {}]
  %s4 = inlined_call_operand.vmem [shape: f32[1,128], index: 4, kind: input, shape index: {}]
  %s5 = inlined_call_operand.hbm [shape: f32[16,128], index: 5, kind: input, shape index: {}]
  %s6 = inlined_call_operand.hbm [shape: f32[32,128], index: 6, kind: input, shape index: {}]
  %s7 = inlined_call_operand.vmem [shape: f32[1,128], index: 7, kind: input, shape index: {}]
  %s8 = inlined_call_operand.hbm [shape: f32[12,16,64], index: 8, kind: output, shape index: {}]
  %s9 = sld [smem:[#allocation0]]
  $region95: #{tpu_custom_call.1} parent=0
    _
  %s11 = ssub.s32 1, %s9
  %s12 = scalar_select 0, %s11, %s9
  $region1: #{tpu_custom_call.1} parent=0
    #allocation4 [shape = 'u8[98304]{0}', space=vmem, size = 0x18000, scoped, tag = 'input window, operand 0']
    #allocation5 [shape = 's32[2]{0}', space=sflag, size = 0x8, scoped, tag = 'scoped memory for tpu_custom_call.1']
    #allocation6 [shape = 's32[2]{0}', space=sflag, size = 0x8, scoped, tag = 'scoped memory for tpu_custom_call.1']
    #allocation7 [shape = 'u8[16384]{0}', space=vmem, size = 0x4000, scoped, tag = 'input window, operand 3, single buffered']
    #allocation8 [shape = 's32[1]{0}', space=sflag, size = 0x4, scoped, tag = 'scoped memory for tpu_custom_call.1']
    #allocation9 [shape = 'u8[8192]{0}', space=vmem, size = 0x2000, scoped, tag = 'input window, operand 5, single buffered']
    #allocation10 [shape = 'u8[16384]{0}', space=vmem, size = 0x4000, scoped, tag = 'input window, operand 6, single buffered']
    #allocation11 [shape = 's32[1]{0}', space=sflag, size = 0x4, scoped, tag = 'scoped memory for tpu_custom_call.1']
    #allocation12 [shape = 'u8[98304]{0}', space=vmem, size = 0x18000, scoped, tag = 'output window, operand 0']
    %13 = vsyncpa [#allocation5], 0
    %s14 = scalar_lea.sflag [#allocation5], 1
    %15 = vsyncpa %s14, 0
    %16 = vsyncpa [#allocation8], 0
    %17 = vsyncpa [#allocation11], 0
    %18 = vsyncpa [#allocation6], 0
    %s19 = scalar_lea.sflag [#allocation6], 1
    %20 = vsyncpa %s19, 0
    loop: start=0, step=1, limit=4
    $region2: #{tpu_custom_call.1} parent=1 // loop_pre_header
      _
    $region3: #{tpu_custom_call.1} parent=1 // loop_header
      %s22 = sphi 0, %s26
      %p23 = scmp.ge.s32.totalorder %s22, 4
      %s32 = sphi 0, %s34
      %s35 = sphi 0, %s32
      %s36 = sphi 0, %s35
      %s52 = sphi 0, %s36
      %s58 = sphi 0, %s60
      %s61 = sphi 0, %s58
      %s62 = sphi 0, %s61
      %s78 = sphi 0, %s62
      %s82 = sphi 0, %s82
      %s84 = sphi 0, %s82
      %s85 = sphi 0, %s84
      %s99 = sphi 0, %s85
      %s103 = sphi 0, %s103
      %s105 = sphi 0, %s103
      %s106 = sphi 0, %s105
      %s120 = sphi 0, %s106
      %s124 = sphi 0, %s124
      %s126 = sphi 0, %s124
      %s127 = sphi 0, %s126
      %s141 = sphi 0, %s127
      %s145 = sphi 0, %s145
      %s147 = sphi 0, %s145
      %s148 = sphi 0, %s147
      %s162 = sphi 0, %s148
      %s166 = sphi 0, %s166
      %s168 = sphi 0, %s166
      %s169 = sphi 0, %s168
      %s183 = sphi 0, %s169
      %s187 = sphi 0, %s187
      %s189 = sphi 0, %s187
      %s190 = sphi 0, %s189
      %s204 = sphi 0, %s190
      %s210 = sphi 0, %s212
      %s213 = sphi 0, %s210
      %s214 = sphi 0, %s213
      %s230 = sphi 0, %s214
    $region4: #{tpu_custom_call.1} parent=1 // loop_header_branch
      %25 = sbr.rel (%p23) target = $region8
    $region5: #{tpu_custom_call.1} parent=1 // loop_body
      %s27 = ssub.s32 %s22, 1
      %s28 = ssub.s32 %s22, 2
      %s29 = sadd.s32 %s22, 1
      %s30 = ssub.s32 %s22, %s29
      %p31 = scmp.eq.s32.totalorder %s30, 0
      %s33 = sadd.s32 %s32, 1
      %s34 = scalar_select %p31, %s32, %s33
      %p37 = pneg %p31
      %p38 = scmp.eq.s32.totalorder %s22, 1
      %p39 = por %p37, %p38
      %p40 = scmp.ne.s32.totalorder %s32, %s35
      %p41 = scmp.eq.s32.totalorder %s22, 0
      %p42 = por %p40, %p41
      %p43 = scmp.ne.s32.totalorder %s32, %s35
      %p44 = scmp.eq.s32.totalorder %s27, 1
      %p45 = por %p43, %p44
      %p46 = scmp.ne.s32.totalorder %s35, %s36
      %p47 = scmp.eq.s32.totalorder %s27, 0
      %p48 = por %p46, %p47
      %p49 = scmp.ne.s32.totalorder %s35, %s36
      %p50 = scmp.eq.s32.totalorder %s28, 1
      %p51 = por %p49, %p50
      %p53 = scmp.ne.s32.totalorder %s36, %s52
      %p54 = scmp.eq.s32.totalorder %s28, 0
      %p55 = por %p53, %p54
      %s56 = ssub.s32 %s22, %s29
      %p57 = scmp.eq.s32.totalorder %s56, 0
      %s59 = sadd.s32 %s58, 1
      %s60 = scalar_select %p57, %s58, %s59
      %p63 = pneg %p57
      %p64 = scmp.eq.s32.totalorder %s22, 1
      %p65 = por %p63, %p64
      %p66 = scmp.ne.s32.totalorder %s58, %s61
      %p67 = scmp.eq.s32.totalorder %s22, 0
      %p68 = por %p66, %p67
      %p69 = scmp.ne.s32.totalorder %s58, %s61
      %p70 = scmp.eq.s32.totalorder %s27, 1
      %p71 = por %p69, %p70
      %p72 = scmp.ne.s32.totalorder %s61, %s62
      %p73 = scmp.eq.s32.totalorder %s27, 0
      %p74 = por %p72, %p73
      %p75 = scmp.ne.s32.totalorder %s61, %s62
      %p76 = scmp.eq.s32.totalorder %s28, 1
      %p77 = por %p75, %p76
      %p79 = scmp.ne.s32.totalorder %s62, %s78
      %p80 = scmp.eq.s32.totalorder %s28, 0
      %p81 = por %p79, %p80
      %s83 = sadd.s32 %s82, 1
      %p86 = scmp.eq.s32.totalorder %s22, 1
      %p87 = scmp.ne.s32.totalorder %s82, %s84
      %p88 = scmp.eq.s32.totalorder %s22, 0
      %p89 = por %p87, %p88
      %p90 = scmp.ne.s32.totalorder %s82, %s84
      %p91 = scmp.eq.s32.totalorder %s27, 1
      %p92 = por %p90, %p91
      %p93 = scmp.ne.s32.totalorder %s84, %s85
      %p94 = scmp.eq.s32.totalorder %s27, 0
      %p95 = por %p93, %p94
      %p96 = scmp.ne.s32.totalorder %s84, %s85
      %p97 = scmp.eq.s32.totalorder %s28, 1
      %p98 = por %p96, %p97
      %p100 = scmp.ne.s32.totalorder %s85, %s99
      %p101 = scmp.eq.s32.totalorder %s28, 0
      %p102 = por %p100, %p101
      %s104 = sadd.s32 %s103, 1
      %p107 = scmp.eq.s32.totalorder %s22, 1
      %p108 = scmp.ne.s32.totalorder %s103, %s105
      %p109 = scmp.eq.s32.totalorder %s22, 0
      %p110 = por %p108, %p109
      %p111 = scmp.ne.s32.totalorder %s103, %s105
      %p112 = scmp.eq.s32.totalorder %s27, 1
      %p113 = por %p111, %p112
      %p114 = scmp.ne.s32.totalorder %s105, %s106
      %p115 = scmp.eq.s32.totalorder %s27, 0
      %p116 = por %p114, %p115
      %p117 = scmp.ne.s32.totalorder %s105, %s106
      %p118 = scmp.eq.s32.totalorder %s28, 1
      %p119 = por %p117, %p118
      %p121 = scmp.ne.s32.totalorder %s106, %s120
      %p122 = scmp.eq.s32.totalorder %s28, 0
      %p123 = por %p121, %p122
      %s125 = sadd.s32 %s124, 1
      %p128 = scmp.eq.s32.totalorder %s22, 1
      %p129 = scmp.ne.s32.totalorder %s124, %s126
      %p130 = scmp.eq.s32.totalorder %s22, 0
      %p131 = por %p129, %p130
      %p132 = scmp.ne.s32.totalorder %s124, %s126
      %p133 = scmp.eq.s32.totalorder %s27, 1
      %p134 = por %p132, %p133
      %p135 = scmp.ne.s32.totalorder %s126, %s127
      %p136 = scmp.eq.s32.totalorder %s27, 0
      %p137 = por %p135, %p136
      %p138 = scmp.ne.s32.totalorder %s126, %s127
      %p139 = scmp.eq.s32.totalorder %s28, 1
      %p140 = por %p138, %p139
      %p142 = scmp.ne.s32.totalorder %s127, %s141
      %p143 = scmp.eq.s32.totalorder %s28, 0
      %p144 = por %p142, %p143
      %s146 = sadd.s32 %s145, 1
      %p149 = scmp.eq.s32.totalorder %s22, 1
      %p150 = scmp.ne.s32.totalorder %s145, %s147
      %p151 = scmp.eq.s32.totalorder %s22, 0
      %p152 = por %p150, %p151
      %p153 = scmp.ne.s32.totalorder %s145, %s147
      %p154 = scmp.eq.s32.totalorder %s27, 1
      %p155 = por %p153, %p154
      %p156 = scmp.ne.s32.totalorder %s147, %s148
      %p157 = scmp.eq.s32.totalorder %s27, 0
      %p158 = por %p156, %p157
      %p159 = scmp.ne.s32.totalorder %s147, %s148
      %p160 = scmp.eq.s32.totalorder %s28, 1
      %p161 = por %p159, %p160
      %p163 = scmp.ne.s32.totalorder %s148, %s162
      %p164 = scmp.eq.s32.totalorder %s28, 0
      %p165 = por %p163, %p164
      %s167 = sadd.s32 %s166, 1
      %p170 = scmp.eq.s32.totalorder %s22, 1
      %p171 = scmp.ne.s32.totalorder %s166, %s168
      %p172 = scmp.eq.s32.totalorder %s22, 0
      %p173 = por %p171, %p172
      %p174 = scmp.ne.s32.totalorder %s166, %s168
      %p175 = scmp.eq.s32.totalorder %s27, 1
      %p176 = por %p174, %p175
      %p177 = scmp.ne.s32.totalorder %s168, %s169
      %p178 = scmp.eq.s32.totalorder %s27, 0
      %p179 = por %p177, %p178
      %p180 = scmp.ne.s32.totalorder %s168, %s169
      %p181 = scmp.eq.s32.totalorder %s28, 1
      %p182 = por %p180, %p181
      %p184 = scmp.ne.s32.totalorder %s169, %s183
      %p185 = scmp.eq.s32.totalorder %s28, 0
      %p186 = por %p184, %p185
      %s188 = sadd.s32 %s187, 1
      %p191 = scmp.eq.s32.totalorder %s22, 1
      %p192 = scmp.ne.s32.totalorder %s187, %s189
      %p193 = scmp.eq.s32.totalorder %s22, 0
      %p194 = por %p192, %p193
      %p195 = scmp.ne.s32.totalorder %s187, %s189
      %p196 = scmp.eq.s32.totalorder %s27, 1
      %p197 = por %p195, %p196
      %p198 = scmp.ne.s32.totalorder %s189, %s190
      %p199 = scmp.eq.s32.totalorder %s27, 0
      %p200 = por %p198, %p199
      %p201 = scmp.ne.s32.totalorder %s189, %s190
      %p202 = scmp.eq.s32.totalorder %s28, 1
      %p203 = por %p201, %p202
      %p205 = scmp.ne.s32.totalorder %s190, %s204
      %p206 = scmp.eq.s32.totalorder %s28, 0
      %p207 = por %p205, %p206
      %s208 = ssub.s32 %s22, %s29
      %p209 = scmp.eq.s32.totalorder %s208, 0
      %s211 = sadd.s32 %s210, 1
      %s212 = scalar_select %p209, %s210, %s211
      %p215 = pneg %p209
      %p216 = scmp.eq.s32.totalorder %s22, 1
      %p217 = por %p215, %p216
      %p218 = scmp.ne.s32.totalorder %s210, %s213
      %p219 = scmp.eq.s32.totalorder %s22, 0
      %p220 = por %p218, %p219
      %p221 = scmp.ne.s32.totalorder %s210, %s213
      %p222 = scmp.eq.s32.totalorder %s27, 1
      %p223 = por %p221, %p222
      %p224 = scmp.ne.s32.totalorder %s213, %s214
      %p225 = scmp.eq.s32.totalorder %s27, 0
      %p226 = por %p224, %p225
      %p227 = scmp.ne.s32.totalorder %s213, %s214
      %p228 = scmp.eq.s32.totalorder %s28, 1
      %p229 = por %p227, %p228
      %p231 = scmp.ne.s32.totalorder %s214, %s230
      %p232 = scmp.eq.s32.totalorder %s28, 0
      %p233 = por %p231, %p232
      %p234 = scmp.le.s32.totalorder 1, %s22
      %p235 = scmp.lt.s32.totalorder %s22, 3
      %p236 = pnand %p234, %p235
      %p237 = pneg %p236
      // Predicated region
      $region9: #{tpu_custom_call.1} parent=5 // pred_check
        _
      $region10: #{tpu_custom_call.1} parent=5 // pred_check_branch
        %239 = sbr.rel (%p236) target = $region12
      $region11: #{tpu_custom_call.1} parent=5 // pred_region
        %s240 = ssub.s32 %s22, 1
        // Predicated region
        $region13: #{tpu_custom_call.1} parent=11 // pred_check
          %p241 = pneg %p95
        $region14: #{tpu_custom_call.1} parent=11 // pred_check_branch
          %243 = sbr.rel (%p241) target = $region16
        $region15: #{tpu_custom_call.1} parent=11 // pred_region
          _
        $region16: #{tpu_custom_call.1} parent=11 // pred_fallthru
          _
        // Predicated region
        $region17: #{tpu_custom_call.1} parent=11 // pred_check
          %p244 = pneg %p116
        $region18: #{tpu_custom_call.1} parent=11 // pred_check_branch
          %246 = sbr.rel (%p244) target = $region20
        $region19: #{tpu_custom_call.1} parent=11 // pred_region
          %248 = vsyncadd [#allocation8], 0
          %s249 = sshll.u32 %s3, 4
          %s250 = int_to_ptr.hbm [resolvable:$true] %s249
          %s251 = sshll.u32 [#allocation7], 4
          %s252 = int_to_ptr.vmem [resolvable:$true] %s251
          %257 = dma.hbm_to_vmem [thread:$0]  %s250, 512, %s252, [#allocation8], 128, 128, 8
        $region20: #{tpu_custom_call.1} parent=11 // pred_fallthru
          _
        // Predicated region
        $region21: #{tpu_custom_call.1} parent=11 // pred_check
          %p258 = pneg %p137
        $region22: #{tpu_custom_call.1} parent=11 // pred_check_branch
          %260 = sbr.rel (%p258) target = $region24
        $region23: #{tpu_custom_call.1} parent=11 // pred_region
          _
        $region24: #{tpu_custom_call.1} parent=11 // pred_fallthru
          _
        // Predicated region
        $region25: #{tpu_custom_call.1} parent=11 // pred_check
          %p261 = pneg %p158
        $region26: #{tpu_custom_call.1} parent=11 // pred_check_branch
          %263 = sbr.rel (%p261) target = $region28
        $region27: #{tpu_custom_call.1} parent=11 // pred_region
          %265 = vsyncadd [#allocation8], 0
          %s266 = sshll.u32 %s5, 4
          %s267 = int_to_ptr.hbm [resolvable:$true] %s266
          %s268 = sshll.u32 [#allocation9], 4
          %s269 = int_to_ptr.vmem [resolvable:$true] %s268
          %274 = dma.hbm_to_vmem [thread:$0]  %s267, 256, %s269, [#allocation8], 128, 128, 8
        $region28: #{tpu_custom_call.1} parent=11 // pred_fallthru
          _
        // Predicated region
        $region29: #{tpu_custom_call.1} parent=11 // pred_check
          %p275 = pneg %p179
        $region30: #{tpu_custom_call.1} parent=11 // pred_check_branch
          %277 = sbr.rel (%p275) target = $region32
        $region31: #{tpu_custom_call.1} parent=11 // pred_region
          %279 = vsyncadd [#allocation11], 0
          %s280 = sshll.u32 %s6, 4
          %s281 = int_to_ptr.hbm [resolvable:$true] %s280
          %s282 = sshll.u32 [#allocation10], 4
          %s283 = int_to_ptr.vmem [resolvable:$true] %s282
          %288 = dma.hbm_to_vmem [thread:$0]  %s281, 512, %s283, [#allocation11], 128, 128, 8
        $region32: #{tpu_custom_call.1} parent=11 // pred_fallthru
          _
        // Predicated region
        $region33: #{tpu_custom_call.1} parent=11 // pred_check
          %p289 = pneg %p200
        $region34: #{tpu_custom_call.1} parent=11 // pred_check_branch
          %291 = sbr.rel (%p289) target = $region36
        $region35: #{tpu_custom_call.1} parent=11 // pred_region
          _
        $region36: #{tpu_custom_call.1} parent=11 // pred_fallthru
          _
      $region12: #{tpu_custom_call.1} parent=5 // pred_fallthru
        _
      %p292 = scmp.lt.s32.totalorder %s22, 2
      // Predicated region
      $region37: #{tpu_custom_call.1} parent=5 // pred_check
        %p293 = pneg %p292
      $region38: #{tpu_custom_call.1} parent=5 // pred_check_branch
        %295 = sbr.rel (%p293) target = $region40
      $region39: #{tpu_custom_call.1} parent=5 // pred_region
        // Predicated region
        $region41: #{tpu_custom_call.1} parent=39 // pred_check
          %p296 = pneg %p42
        $region42: #{tpu_custom_call.1} parent=39 // pred_check_branch
          %298 = sbr.rel (%p296) target = $region44
        $region43: #{tpu_custom_call.1} parent=39 // pred_region
          %s299 = sand.u32 %s32, 1
          %s300 = scalar_lea.sflag [#allocation5], %s299
          %s301 = sand.u32 %s32, 1
          %s302 = smul.addr %s301, 96
          %s303 = scalar_lea.vmem [#allocation4], %s302
          %305 = vsyncadd %s300, 0
          %s306 = smul.addr %s22, 8
          %s307 = scalar_lea.hbm %s0, %s306
          %s308 = sshll.u32 %s307, 4
          %s309 = int_to_ptr.hbm [resolvable:$true] %s308
          %s310 = sshll.u32 %s303, 4
          %s311 = int_to_ptr.vmem [resolvable:$true] %s310
          %316 = dma.hbm_to_vmem [thread:$0]  %s309, 1536, %s311, %s300, 256, 128, 8
        $region44: #{tpu_custom_call.1} parent=39 // pred_fallthru
          _
        // Predicated region
        $region45: #{tpu_custom_call.1} parent=39 // pred_check
          %p317 = pneg %p68
        $region46: #{tpu_custom_call.1} parent=39 // pred_check_branch
          %319 = sbr.rel (%p317) target = $region48
        $region47: #{tpu_custom_call.1} parent=39 // pred_region
          %p320 = scmp.lt.s32.totalorder %s22, 1
          %s321 = scalar_select %p320, %s22, 1
          %s322 = smul.addr %s321, 8
          %s323 = scalar_lea.vmem %s1, %s322
        $region48: #{tpu_custom_call.1} parent=39 // pred_fallthru
          _
      $region40: #{tpu_custom_call.1} parent=5 // pred_fallthru
        _
      %p324 = scmp.le.s32.totalorder 1, %s22
      %p325 = scmp.lt.s32.totalorder %s22, 3
      %p326 = pnand %p324, %p325
      %p327 = pneg %p326
      // Predicated region
      $region49: #{tpu_custom_call.1} parent=5 // pred_check
        _
      $region50: #{tpu_custom_call.1} parent=5 // pred_check_branch
        %329 = sbr.rel (%p326) target = $region52
      $region51: #{tpu_custom_call.1} parent=5 // pred_region
        %s330 = ssub.s32 %s22, 1
        %s331 = sand.u32 %s35, 1
        %s332 = scalar_lea.sflag [#allocation5], %s331
        %s333 = sand.u32 %s35, 1
        %s334 = smul.addr %s333, 96
        %s335 = scalar_lea.vmem [#allocation4], %s334
        // Predicated region
        $region53: #{tpu_custom_call.1} parent=51 // pred_check
          %p336 = pneg %p48
        $region54: #{tpu_custom_call.1} parent=51 // pred_check_branch
          %338 = sbr.rel (%p336) target = $region56
        $region55: #{tpu_custom_call.1} parent=51 // pred_region
          %340 = dma.done %s332, 1536
        $region56: #{tpu_custom_call.1} parent=51 // pred_fallthru
          _
        // Predicated region
        $region57: #{tpu_custom_call.1} parent=51 // pred_check
          %p341 = pneg %p116
        $region58: #{tpu_custom_call.1} parent=51 // pred_check_branch
          %343 = sbr.rel (%p341) target = $region60
        $region59: #{tpu_custom_call.1} parent=51 // pred_region
          %345 = dma.done [#allocation8], 512
        $region60: #{tpu_custom_call.1} parent=51 // pred_fallthru
          _
        // Predicated region
        $region61: #{tpu_custom_call.1} parent=51 // pred_check
          %p346 = pneg %p158
        $region62: #{tpu_custom_call.1} parent=51 // pred_check_branch
          %348 = sbr.rel (%p346) target = $region64
        $region63: #{tpu_custom_call.1} parent=51 // pred_region
          %350 = dma.done [#allocation8], 256
        $region64: #{tpu_custom_call.1} parent=51 // pred_fallthru
          _
        // Predicated region
        $region65: #{tpu_custom_call.1} parent=51 // pred_check
          %p351 = pneg %p179
        $region66: #{tpu_custom_call.1} parent=51 // pred_check_branch
          %353 = sbr.rel (%p351) target = $region68
        $region67: #{tpu_custom_call.1} parent=51 // pred_region
          %355 = dma.done [#allocation11], 512
        $region68: #{tpu_custom_call.1} parent=51 // pred_fallthru
          _
        %s356 = sand.u32 %s35, 1
        %s357 = scalar_lea.sflag [#allocation5], %s356
        %s358 = sand.u32 %s35, 1
        %s359 = smul.addr %s358, 96
        %s360 = scalar_lea.vmem [#allocation4], %s359
        %p361 = pneg %p48
        %p362 = pneg %p45
        %p363 = scmp.lt.s32.totalorder %s27, 1
        %s364 = scalar_select %p363, %s27, 1
        %s365 = smul.addr %s364, 8
        %s366 = scalar_lea.vmem %s1, %s365
        %p367 = pneg %p74
        %p368 = pneg %p71
        %p369 = pneg %p95
        %p370 = pneg %p92
        %p371 = pneg %p116
        %p372 = pneg %p113
        %p373 = pneg %p137
        %p374 = pneg %p134
        %p375 = pneg %p158
        %p376 = pneg %p155
        %p377 = pneg %p179
        %p378 = pneg %p176
        %p379 = pneg %p200
        %p380 = pneg %p197
        %p381 = pneg %p226
        %p382 = pneg %p223
        %s383 = sand.u32 %s213, 1
        %s384 = scalar_lea.sflag [#allocation6], %s383
        %s385 = sand.u32 %s213, 1
        %s386 = smul.addr %s385, 96
        %s387 = scalar_lea.vmem [#allocation12], %s386
        %p388 = scmp.lt.s32.totalorder %s27, 1
        %s389 = scalar_select %p388, %s27, 1
        %s390 = smul.addr %s389, 8
        %s391 = scalar_lea.vmem %s1, %s390
        %v392 = vld [vmem:[%s391] sm:$0xff]
        %v393 = vld [vmem:[%s2] sm:$0xff]
        %v394 = vld [vmem:[%s2 + $0x8] sm:$0xff]
        %v395 = vld [vmem:[#allocation9] sm:$0xff]
        %v396 = vld [vmem:[#allocation9 + $0x8] sm:$0xff]
        %v397 = vld [vmem:[%s4] sm:$0x1]
        %v398 = vld [vmem:[%s7] sm:$0x1]
        %v399 = vld [vmem:[#allocation7] sm:$0xff]
        %v400 = vld [vmem:[#allocation7 + $0x8] sm:$0xff]
        %v401 = vld [vmem:[#allocation7 + $0x10] sm:$0xff]
        %v402 = vld [vmem:[#allocation7 + $0x18] sm:$0xff]
        %v403 = vld [vmem:[#allocation10] sm:$0xff]
        %v404 = vld [vmem:[#allocation10 + $0x8] sm:$0xff]
        %v405 = vld [vmem:[#allocation10 + $0x10] sm:$0xff]
        %v406 = vld [vmem:[#allocation10 + $0x18] sm:$0xff]
        loop: start=0, step=1, limit=3
        $region69: #{tpu_custom_call.1} parent=51 // loop_pre_header
          _
        $region70: #{tpu_custom_call.1} parent=51 // loop_header
          %s408 = sphi 0, %s412
          %p409 = scmp.ge.s32.totalorder %s408, 3
          %v413 = vphi 0.0, %v535
          %v414 = vphi 0.0, %v536
          %v415 = vphi 0.0, %v537
          %v416 = vphi 0.0, %v538
        $region71: #{tpu_custom_call.1} parent=51 // loop_header_branch
          %411 = sbr.rel (%p409) target = $region75
        $region72: #{tpu_custom_call.1} parent=51 // loop_body
          %s417 = ssub.s32 2, %s408
          %s418 = smul.u32 %s408, 4
          %s419 = smul.u32 %s417, 4
          %s420 = smul.u32 %s418, 8
          %s421 = scalar_lea.vmem %s335, %s420 [#allocation4]
          %v422 = vld [vmem:[%s421] sm:$0xff]
          %v423 = vld [vmem:[%s421 + $0x8] sm:$0xff]
          %v424 = vld [vmem:[%s421 + $0x10] sm:$0xff]
          %v425 = vld [vmem:[%s421 + $0x18] sm:$0xff]
          %s426 = smul.u32 %s419, 8
          %s427 = scalar_lea.vmem %s335, %s426 [#allocation4]
          %v428 = vld [vmem:[%s427] sm:$0xff]
          %v429 = vld [vmem:[%s427 + $0x8] sm:$0xff]
          %v430 = vld [vmem:[%s427 + $0x10] sm:$0xff]
          %v431 = vld [vmem:[%s427 + $0x18] sm:$0xff]
          %v433 = vperm.slane %v397, 0
          %vm435 = vcmask 130048
          %v437 = vsel %vm435, %v422, 0
          %v440 = vsel %vm435, %v423, 0
          %v443 = vsel %vm435, %v424, 0
          %v446 = vsel %vm435, %v425, 0
          %448 = vmatpush.msra.mxu0 0.0
          %449 = vmatpush.msra.mxu0 0.0
          %450 = vmatpush.msra.mxu0 0.0
          %451 = vmatpush.msra.mxu0 0.0
          %452 = vmatpush.msra.mxu0 0.0
          %453 = vmatpush.msra.mxu0 0.0
          %454 = vmatpush.msra.mxu0 0.0
          %455 = vmatpush.msra.mxu0 0.0
          %456 = vmatpush.msra.mxu0 0.0
          %457 = vmatpush.msra.mxu0 0.0
          %458 = vmatpush.msra.mxu0 0.0
          %459 = vmatpush.msra.mxu0 0.0
          %460 = vmatpush.msra.mxu0 0.0
          %461 = vmatpush.msra.mxu0 0.0
          %462 = vmatpush.msra.mxu0 %v394
          %463 = vmatpush.msra.mxu0 %v393
          %464 = vmatmul.f32.gmra.mxu0 %v437
          %v465 = vpop.f32.mrf.mxu0
          %v466 = vadd.f32 %v433, %v465
          %467 = vmatmul.f32.gmra.mxu0 %v440
          %v468 = vpop.f32.mrf.mxu0
          %v469 = vadd.f32 %v433, %v468
          %470 = vmatmul.f32.gmra.mxu0 %v443
          %v471 = vpop.f32.mrf.mxu0
          %v472 = vadd.f32 %v433, %v471
          %473 = vmatmul.f32.gmra.mxu0 %v446
          %v474 = vpop.f32.mrf.mxu0
          %v475 = vadd.f32 %v433, %v474
          %476 = vdwg.mxu0
          %477 = vst [vmem:[#allocation2] sm:$0xff] %v466
          %478 = vst [vmem:[#allocation2 + $0x8] sm:$0xff] %v469
          %479 = vst [vmem:[#allocation2 + $0x10] sm:$0xff] %v472
          %480 = vst [vmem:[#allocation2 + $0x18] sm:$0xff] %v475
          %v482 = vperm.slane %v398, 0
          %v485 = vsel %vm435, %v428, 0
          %v488 = vsel %vm435, %v429, 0
          %v491 = vsel %vm435, %v430, 0
          %v494 = vsel %vm435, %v431, 0
          %496 = vmatpush.msra.mxu0 0.0
          %497 = vmatpush.msra.mxu0 0.0
          %498 = vmatpush.msra.mxu0 0.0
          %499 = vmatpush.msra.mxu0 0.0
          %500 = vmatpush.msra.mxu0 0.0
          %501 = vmatpush.msra.mxu0 0.0
          %502 = vmatpush.msra.mxu0 0.0
          %503 = vmatpush.msra.mxu0 0.0
          %504 = vmatpush.msra.mxu0 0.0
          %505 = vmatpush.msra.mxu0 0.0
          %506 = vmatpush.msra.mxu0 0.0
          %507 = vmatpush.msra.mxu0 0.0
          %508 = vmatpush.msra.mxu0 0.0
          %509 = vmatpush.msra.mxu0 0.0
          %510 = vmatpush.msra.mxu0 %v396
          %511 = vmatpush.msra.mxu0 %v395
          %512 = vmatmul.f32.gmra.mxu0 %v485
          %v513 = vpop.f32.mrf.mxu0
          %v514 = vadd.f32 %v482, %v513
          %515 = vmatmul.f32.gmra.mxu0 %v488
          %v516 = vpop.f32.mrf.mxu0
          %v517 = vadd.f32 %v482, %v516
          %518 = vmatmul.f32.gmra.mxu0 %v491
          %v519 = vpop.f32.mrf.mxu0
          %v520 = vadd.f32 %v482, %v519
          %521 = vmatmul.f32.gmra.mxu0 %v494
          %v522 = vpop.f32.mrf.mxu0
          %v523 = vadd.f32 %v482, %v522
          %524 = vdwg.mxu0
          %525 = vst [vmem:[#allocation3] sm:$0xff] %v514
          %526 = vst [vmem:[#allocation3 + $0x8] sm:$0xff] %v517
          %527 = vst [vmem:[#allocation3 + $0x10] sm:$0xff] %v520
          %528 = vst [vmem:[#allocation3 + $0x18] sm:$0xff] %v523
          loop: start=0, step=1, limit=4
          $region76: #{tpu_custom_call.1} parent=72 // loop_pre_header
            _
          $region77: #{tpu_custom_call.1} parent=72 // loop_header
            %s530 = sphi 0, %s534
            %p531 = scmp.ge.s32.totalorder %s530, 4
            %v535 = vphi %v413, %v624
            %v536 = vphi %v414, %v625
            %v537 = vphi %v415, %v708
            %v538 = vphi %v416, %v709
          $region78: #{tpu_custom_call.1} parent=72 // loop_header_branch
            %533 = sbr.rel (%p531) target = $region82
          $region79: #{tpu_custom_call.1} parent=72 // loop_body
            %s539 = sadd.s32 %s418, %s530
            %s540 = ssub.s32 3, %s530
            %s541 = sadd.s32 %s419, %s540
            %s542 = smul.u32 %s530, 8
            %s543 = scalar_lea.vmem [#allocation2], %s542
            %v544 = vld [vmem:[%s543] sm:$0xff]
            %546 = vrot.lane.b32.xlu0 %v535, 64
            %v547 = vpop.permute.xlu0 %546
            %vm548 = vcmask 261120
            %v549 = vsel %vm548, %v547, 0
            %551 = vmatpush.msra.mxu0 0.0
            %552 = vmatpush.msra.mxu0 0.0
            %553 = vmatpush.msra.mxu0 0.0
            %554 = vmatpush.msra.mxu0 0.0
            %555 = vmatpush.msra.mxu0 0.0
            %556 = vmatpush.msra.mxu0 0.0
            %557 = vmatpush.msra.mxu0 0.0
            %558 = vmatpush.msra.mxu0 0.0
            %559 = vmatpush.msra.mxu0 0.0
            %560 = vmatpush.msra.mxu0 0.0
            %561 = vmatpush.msra.mxu0 0.0
            %562 = vmatpush.msra.mxu0 0.0
            %563 = vmatpush.msra.mxu0 %v402
            %564 = vmatpush.msra.mxu0 %v401
            %565 = vmatpush.msra.mxu0 %v400
            %566 = vmatpush.msra.mxu0 %v399
            %567 = vmatmul.f32.gmra.mxu0 %v549
            %v568 = vpop.f32.mrf.mxu0
            %v569 = vadd.f32 0.0, %v568
            %570 = vdwg.mxu0
            %v571 = vadd.f32 %v544, %v569
            %v572 = vxor.u32 %v571, 2147483648
            %v573 = vmul.f32 %v572, 1.442695
            %v574 = vpow.pop %v573
            %v575 = vadd.f32 %v574, 1.0
            %v576 = vrcp.pop %v575
            %v577 = vmul.f32 %v575, %v576
            %v578 = vsub.f32 1.0, %v577
            %v579 = vmul.f32 %v576, %v578
            %v580 = vadd.f32 %v576, %v579
            %vm581 = vweird.f32 %v575
            %vm582 = vweird.f32 %v576
            %vm583 = vmor %vm581, %vm582
            %v584 = vsel %vm583, %v576, %v580
            %v585 = vand.u32 2147483647, %v575
            %vm586 = vcmp.eq.f32.partialorder %v585, 8.507059e+37
            %v587 = vand.u32 %v575, 2147483648
            %v588 = vor.u32 1.1754944e-38, %v587
            %v589 = vsel %vm586, %v588, %v584
            %v590 = vmul.f32 1.0, %v589
            %v591 = vtanh.pop %v571
            %v592 = vmul.f32 %v590, %v536
            %594 = vrot.lane.b32.xlu0 %v591, 32
            %v595 = vpop.permute.xlu0 %594
            %v597 = vmul.f32 %v590, %v595
            %599 = vrot.lane.b32.xlu0 %v597, 32
            %v600 = vpop.permute.xlu0 %599
            %v602 = vadd.f32 %v592, %v600
            %v603 = vtanh.pop %v602
            %605 = vrot.lane.b32.xlu0 %v603, 32
            %v606 = vpop.permute.xlu0 %605
            %v608 = vmul.f32 %v590, %v606
            %v609 = vstv %s539
            %vm610 = vcmp.lt.s32.totalorder %v609, %v392
            %v611 = vsel %vm610, 1, 0
            %612 = vset.pattern.permute.xlu0 0
            %613 = vperm.xlu0 %612, %v611
            %v614 = vpop.permute.xlu0 %613
            %vm615 = vcmp.eq.s32.totalorder %v614, 1
            %v616 = vsel %vm615, %v608, 0.0
            %618 = vrot.lane.b32.xlu0 %v616, 64
            %v619 = vpop.permute.xlu0 %618
            %s621 = smul.u32 %s539, 8
            %s622 = scalar_lea.vmem %s387, %s621 [#allocation12]
            %623 = vst.msk [vmem:[%s622] sm:$0xff] %vm548, %v619
            %v624 = vsel %vm615, %v608, %v535
            %v625 = vsel %vm615, %v602, %v536
            %s626 = smul.u32 %s540, 8
            %s627 = scalar_lea.vmem [#allocation3], %s626
            %v628 = vld [vmem:[%s627] sm:$0xff]
            %630 = vrot.lane.b32.xlu0 %v537, 64
            %v631 = vpop.permute.xlu0 %630
            %v632 = vsel %vm548, %v631, 0
            %634 = vmatpush.msra.mxu0 0.0
            %635 = vmatpush.msra.mxu0 0.0
            %636 = vmatpush.msra.mxu0 0.0
            %637 = vmatpush.msra.mxu0 0.0
            %638 = vmatpush.msra.mxu0 0.0
            %639 = vmatpush.msra.mxu0 0.0
            %640 = vmatpush.msra.mxu0 0.0
            %641 = vmatpush.msra.mxu0 0.0
            %642 = vmatpush.msra.mxu0 0.0
            %643 = vmatpush.msra.mxu0 0.0
            %644 = vmatpush.msra.mxu0 0.0
            %645 = vmatpush.msra.mxu0 0.0
            %646 = vmatpush.msra.mxu0 %v406
            %647 = vmatpush.msra.mxu0 %v405
            %648 = vmatpush.msra.mxu0 %v404
            %649 = vmatpush.msra.mxu0 %v403
            %650 = vmatmul.f32.gmra.mxu0 %v632
            %v651 = vpop.f32.mrf.mxu0
            %v652 = vadd.f32 0.0, %v651
            %653 = vdwg.mxu0
            %v654 = vadd.f32 %v628, %v652
            %v655 = vxor.u32 %v654, 2147483648
            %v656 = vmul.f32 %v655, 1.442695
            %v657 = vpow.pop %v656
            %v658 = vadd.f32 %v657, 1.0
            %v659 = vrcp.pop %v658
            %v660 = vmul.f32 %v658, %v659
            %v661 = vsub.f32 1.0, %v660
            %v662 = vmul.f32 %v659, %v661
            %v663 = vadd.f32 %v659, %v662
            %vm664 = vweird.f32 %v658
            %vm665 = vweird.f32 %v659
            %vm666 = vmor %vm664, %vm665
            %v667 = vsel %vm666, %v659, %v663
            %v668 = vand.u32 2147483647, %v658
            %vm669 = vcmp.eq.f32.partialorder %v668, 8.507059e+37
            %v670 = vand.u32 %v658, 2147483648
            %v671 = vor.u32 1.1754944e-38, %v670
            %v672 = vsel %vm669, %v671, %v667
            %v673 = vmul.f32 1.0, %v672
            %v674 = vtanh.pop %v654
            %v675 = vmul.f32 %v673, %v538
            %677 = vrot.lane.b32.xlu0 %v674, 32
            %v678 = vpop.permute.xlu0 %677
            %v680 = vmul.f32 %v673, %v678
            %682 = vrot.lane.b32.xlu0 %v680, 32
            %v683 = vpop.permute.xlu0 %682
            %v685 = vadd.f32 %v675, %v683
            %v686 = vtanh.pop %v685
            %688 = vrot.lane.b32.xlu0 %v686, 32
            %v689 = vpop.permute.xlu0 %688
            %v691 = vmul.f32 %v673, %v689
            %v692 = vstv %s541
            %vm693 = vcmp.lt.s32.totalorder %v692, %v392
            %v694 = vsel %vm693, 1, 0
            %695 = vset.pattern.permute.xlu0 0
            %696 = vperm.xlu0 %695, %v694
            %v697 = vpop.permute.xlu0 %696
            %vm698 = vcmp.eq.s32.totalorder %v697, 1
            %v699 = vsel %vm698, %v691, 0.0
            %701 = vrot.lane.b32.xlu0 %v699, 96
            %v702 = vpop.permute.xlu0 %701
            %s704 = smul.u32 %s541, 8
            %s705 = scalar_lea.vmem %s387, %s704 [#allocation12]
            %vm706 = vcmask 523520
            %707 = vst.msk [vmem:[%s705] sm:$0xff] %vm706, %v702
            %v708 = vsel %vm698, %v691, %v537
            %v709 = vsel %vm698, %v685, %v538
          $region80: #{tpu_custom_call.1} parent=72 // loop_footer
            %s534 = sadd.s32 1, %s530
          $region81: #{tpu_custom_call.1} parent=72 // loop_footer_branch
            %529 = sbr.rel target = $region77
          $region82: #{tpu_custom_call.1} parent=72 // loop_exit
            _
        $region73: #{tpu_custom_call.1} parent=51 // loop_footer
          %s412 = sadd.s32 1, %s408
        $region74: #{tpu_custom_call.1} parent=51 // loop_footer_branch
          %407 = sbr.rel target = $region70
        $region75: #{tpu_custom_call.1} parent=51 // loop_exit
          _
        %s710 = sand.u32 %s213, 1
        %s711 = scalar_lea.sflag [#allocation6], %s710
        %s712 = sand.u32 %s213, 1
        %s713 = smul.addr %s712, 96
        %s714 = scalar_lea.vmem [#allocation12], %s713
        // Predicated region
        $region83: #{tpu_custom_call.1} parent=51 // pred_check
          %p715 = pneg %p223
        $region84: #{tpu_custom_call.1} parent=51 // pred_check_branch
          %717 = sbr.rel (%p715) target = $region86
        $region85: #{tpu_custom_call.1} parent=51 // pred_region
          %719 = vsyncadd %s711, 0
          %s720 = smul.addr %s27, 8
          %s721 = scalar_lea.hbm %s8, %s720
          %s722 = sshll.u32 %s714, 4
          %s723 = int_to_ptr.vmem [resolvable:$true] %s722
          %s724 = sshll.u32 %s721, 4
          %s725 = int_to_ptr.hbm [resolvable:$true] %s724
          %730 = dma.vmem_to_hbm [thread:$0]  %s723, 1536, %s725, %s711, 128, 256, 8
        $region86: #{tpu_custom_call.1} parent=51 // pred_fallthru
          _
      $region52: #{tpu_custom_call.1} parent=5 // pred_fallthru
        _
      %p731 = scmp.le.s32.totalorder 2, %s22
      // Predicated region
      $region87: #{tpu_custom_call.1} parent=5 // pred_check
        %p732 = pneg %p731
      $region88: #{tpu_custom_call.1} parent=5 // pred_check_branch
        %734 = sbr.rel (%p732) target = $region90
      $region89: #{tpu_custom_call.1} parent=5 // pred_region
        %s735 = ssub.s32 %s22, 2
        // Predicated region
        $region91: #{tpu_custom_call.1} parent=89 // pred_check
          %p736 = pneg %p229
        $region92: #{tpu_custom_call.1} parent=89 // pred_check_branch
          %738 = sbr.rel (%p736) target = $region94
        $region93: #{tpu_custom_call.1} parent=89 // pred_region
          %s739 = sand.u32 %s214, 1
          %s740 = scalar_lea.sflag [#allocation6], %s739
          %s741 = sand.u32 %s214, 1
          %s742 = smul.addr %s741, 96
          %s743 = scalar_lea.vmem [#allocation12], %s742
          %745 = dma.done %s740, 1536
        $region94: #{tpu_custom_call.1} parent=89 // pred_fallthru
          _
      $region90: #{tpu_custom_call.1} parent=5 // pred_fallthru
        _
    $region6: #{tpu_custom_call.1} parent=1 // loop_footer
      %s26 = sadd.s32 1, %s22
    $region7: #{tpu_custom_call.1} parent=1 // loop_footer_branch
      %21 = sbr.rel target = $region3
    $region8: #{tpu_custom_call.1} parent=1 // loop_exit
      _
    %746 = vsyncpa [#allocation5], 1
    %s747 = scalar_lea.sflag [#allocation5], 1
    %748 = vsyncpa %s747, 1
    %749 = vsyncpa [#allocation8], 1
    %750 = vsyncpa [#allocation11], 1
    %751 = vsyncpa [#allocation6], 1
    %s752 = scalar_lea.sflag [#allocation6], 1
    %753 = vsyncpa %s752, 1

</llo_original>
